<compile_context>
chip_gen: v7x
topology: tpu7x:2x2x1
jax: 0.10.0
libtpu: 0.0.40
codegen_flags: <defaults>
</compile_context>

<pallas_src>
import functools

import jax
import jax.numpy as jnp
from jax import lax
from jax.experimental import pallas as pl
from jax.experimental.pallas import tpu as pltpu

_LANES = 128
_TARGET_BLOCK_BYTES = 2 * 1024 * 1024     # ~2 MiB per block per operand


def _to_i32(v):
    """Reinterpret an unsigned 32-bit Python int as a signed int32 value."""
    v &= 0xFFFFFFFF
    return v - (1 << 32) if v >= (1 << 31) else v


# Hash constants (lowbias32 finalizer), pre-converted to signed int32 so every
# in-kernel integer op stays in plain i32.
_GOLDEN = _to_i32(0x9E3779B9)
_M1 = _to_i32(0x7FEB352D)
_M2 = _to_i32(0x846CA68B)


def _lsr(x, k):
    """Logical right shift for int32 arrays (arithmetic shift + mask)."""
    return (x >> k) & ((1 << (32 - k)) - 1)


def _dropout_kernel(seed_ref, x_ref, o_ref, *, threshold24, scale,
                    block_rows, n_cols):
    shape = x_ref.shape
    row0 = pl.program_id(0) * block_rows
    r = lax.broadcasted_iota(jnp.int32, shape, 0) + row0
    c = lax.broadcasted_iota(jnp.int32, shape, 1)
    idx = r * n_cols + c                      # unique global element index

    # Counter-based RNG: lowbias32-style avalanche mixer of (index, seed).
    h = idx * _GOLDEN + seed_ref[0]
    h = h ^ _lsr(h, 16)
    h = h * _M1
    h = h ^ _lsr(h, 15)
    h = h * _M2
    h = h ^ _lsr(h, 16)

    bits24 = _lsr(h, 8)                       # uniform int in [0, 2^24)
    keep = bits24 >= threshold24              # P(drop) = threshold24 / 2^24 ~= p
    o_ref[...] = jnp.where(keep, x_ref[...] * scale, 0).astype(o_ref.dtype)


def dropout_pallas(x, p, seed=0):
    """Apply dropout with drop-probability p (training semantics)."""
    p = float(p)
    if p <= 0.0:
        return x
    p = min(p, 1.0)

    orig_shape = x.shape
    n = int(x.size)
    if n == 0:
        return x

    flat = x.reshape(-1)

    # Choose a lane-dense column count (multiple of 128) that divides n so the
    # wrapper adds no pad / slice HBM passes around a purely mem-bound kernel.
    cols = None
    for c in (4096, 2048, 1024, 512, 256, 128):
        if n % c == 0:
            cols = c
            break
    padded = False
    if cols is None:
        # Ragged flat size: fall back to padding the tail (rare path).
        cols = _LANES
        pad = (-n) % cols
        flat = jnp.pad(flat, (0, pad))
        padded = True

    rows = flat.shape[0] // cols
    x2d = flat.reshape(rows, cols)

    # Block rows: fill ~2 MiB per operand.  With in+out double-buffered that is
    # ~8 MiB VMEM, safe on v5e (16 MiB default scoped), v6e and v7x (32 MiB).
    bytes_per_row = cols * x2d.dtype.itemsize
    max_rows = max(8, _TARGET_BLOCK_BYTES // bytes_per_row)
    if rows <= max_rows:
        block_rows = rows                       # full dim -> always legal
    else:
        block_rows = (max_rows // 8) * 8        # sublane aligned; ragged tail OK

    grid = (pl.cdiv(rows, block_rows),)

    threshold24 = min(int(round(p * (1 << 24))), 1 << 24)   # no uint wrap at p=1
    scale = 1.0 / (1.0 - p) if p < 1.0 else 0.0
    seed_arr = jnp.array([_to_i32(int(seed))], dtype=jnp.int32)

    kernel = functools.partial(
        _dropout_kernel,
        threshold24=threshold24, scale=scale,
        block_rows=block_rows, n_cols=cols)

    out2d = pl.pallas_call(
        kernel,
        out_shape=jax.ShapeDtypeStruct(x2d.shape, x2d.dtype),
        grid_spec=pltpu.PrefetchScalarGridSpec(
            num_scalar_prefetch=1,              # seed lands in SMEM (no recompile per step)
            grid=grid,
            in_specs=[pl.BlockSpec((block_rows, cols), lambda i, s: (i, 0))],
            out_specs=pl.BlockSpec((block_rows, cols), lambda i, s: (i, 0)),
        ),
        compiler_params=pltpu.CompilerParams(
            # Blocks are order-independent (counter-based hash) -> shard across
            # both TensorCores on v7x; neutral on v5e/v6e.
            dimension_semantics=("parallel",),
            vmem_limit_bytes=32 * 1024 * 1024,
        ),
        cost_estimate=pl.CostEstimate(
            flops=2 * n,
            transcendentals=0,
            bytes_accessed=2 * n * x2d.dtype.itemsize),
    )(seed_arr, x2d)

    if padded:
        return out2d.reshape(-1)[:n].reshape(orig_shape)
    return out2d.reshape(orig_shape)


class Dropout:
    """Mirror of the PyTorch module (forward semantics only)."""

    def __init__(self, p):
        self.p = p
        self.apply_during_inference = False
        self.training = True  # default nn.Module state

    def __call__(self, x, inplace: bool = False, seed: int = 0):
        # TODO(synk): `inplace` has no meaning for immutable JAX arrays; ignored.
        if self.training or self.apply_during_inference:
            return dropout_pallas(x, self.p, seed=seed)
        return x


if __name__ == "__main__":
    key = jax.random.PRNGKey(0)
    x = jax.random.normal(key, (2, 4, 16, 16), dtype=jnp.float32)

    p = 0.5
    drop = Dropout(p)

    # training path (kernel)
    y = drop(x, seed=1234)
    y = jax.block_until_ready(y)

    # eval path (identity)
    drop.training = False
    y_eval = jax.block_until_ready(drop(x))

    # sanity checks
    assert y.shape == x.shape and y.dtype == x.dtype
    assert bool(jnp.all(y_eval == x))
    kept_mask = y != 0
    # surviving elements must equal x / (1 - p)
    max_err = jnp.max(jnp.abs(jnp.where(kept_mask, y - x / (1.0 - p), 0.0)))
    assert float(max_err) < 1e-5, float(max_err)
    # drop rate should be roughly p
    drop_frac = 1.0 - float(jnp.mean(kept_mask.astype(jnp.float32)))
    assert abs(drop_frac - p) < 0.1, drop_frac

    print("KERNEL_OK")
</pallas_src>

<mosaic_0001>
module attributes {stable_mosaic.version = 11 : i64} {
  func.func @_dropout_kernel(%arg0: i32, %arg1: memref<1xi32, #tpu.memory_space<smem>>, %arg2: memref<1x2048xf32, #tpu.memory_space<vmem>>, %arg3: memref<1x2048xf32, #tpu.memory_space<vmem>>) attributes {dimension_semantics = [#tpu.dimension_semantics<parallel>], iteration_bounds = array<i64: 1>, scalar_prefetch = 1 : i64, scratch_operands = 0 : i64, tpu.core_type = #tpu.core_type<tc>, window_params = [{transform_indices = @transform_0, window_bounds = array<i64: 1, 2048>}, {transform_indices = @transform_1, window_bounds = array<i64: 1, 2048>}]} {
    %c1_i32 = arith.constant 1 : i32
    %0 = arith.muli %arg0, %c1_i32 : i32
    %1 = tpu.iota {dimensions = array<i32: 0>} : vector<1x2048xi32>
    %2 = vector.broadcast %0 : i32 to vector<1x2048xi32>
    %3 = arith.addi %1, %2 : vector<1x2048xi32>
    %4 = tpu.iota {dimensions = array<i32: 1>} : vector<1x2048xi32>
    %c2048_i32 = arith.constant 2048 : i32
    %5 = vector.broadcast %c2048_i32 : i32 to vector<1x2048xi32>
    %6 = arith.muli %3, %5 : vector<1x2048xi32>
    %7 = arith.addi %6, %4 : vector<1x2048xi32>
    %c-1640531527_i32 = arith.constant -1640531527 : i32
    %8 = vector.broadcast %c-1640531527_i32 : i32 to vector<1x2048xi32>
    %9 = arith.muli %7, %8 : vector<1x2048xi32>
    %c0 = arith.constant 0 : index
    %10 = memref.load %arg1[%c0] : memref<1xi32, #tpu.memory_space<smem>>
    %11 = vector.broadcast %10 : i32 to vector<1x2048xi32>
    %12 = arith.addi %9, %11 : vector<1x2048xi32>
    %c16_i32 = arith.constant 16 : i32
    %13 = vector.broadcast %c16_i32 : i32 to vector<1x2048xi32>
    %14 = arith.shrsi %12, %13 : vector<1x2048xi32>
    %c65535_i32 = arith.constant 65535 : i32
    %15 = vector.broadcast %c65535_i32 : i32 to vector<1x2048xi32>
    %16 = arith.andi %14, %15 : vector<1x2048xi32>
    %17 = arith.xori %12, %16 : vector<1x2048xi32>
    %c2146121005_i32 = arith.constant 2146121005 : i32
    %18 = vector.broadcast %c2146121005_i32 : i32 to vector<1x2048xi32>
    %19 = arith.muli %17, %18 : vector<1x2048xi32>
    %c15_i32 = arith.constant 15 : i32
    %20 = vector.broadcast %c15_i32 : i32 to vector<1x2048xi32>
    %21 = arith.shrsi %19, %20 : vector<1x2048xi32>
    %c131071_i32 = arith.constant 131071 : i32
    %22 = vector.broadcast %c131071_i32 : i32 to vector<1x2048xi32>
    %23 = arith.andi %21, %22 : vector<1x2048xi32>
    %24 = arith.xori %19, %23 : vector<1x2048xi32>
    %c-2073254261_i32 = arith.constant -2073254261 : i32
    %25 = vector.broadcast %c-2073254261_i32 : i32 to vector<1x2048xi32>
    %26 = arith.muli %24, %25 : vector<1x2048xi32>
    %c16_i32_0 = arith.constant 16 : i32
    %27 = vector.broadcast %c16_i32_0 : i32 to vector<1x2048xi32>
    %28 = arith.shrsi %26, %27 : vector<1x2048xi32>
    %c65535_i32_1 = arith.constant 65535 : i32
    %29 = vector.broadcast %c65535_i32_1 : i32 to vector<1x2048xi32>
    %30 = arith.andi %28, %29 : vector<1x2048xi32>
    %31 = arith.xori %26, %30 : vector<1x2048xi32>
    %c8_i32 = arith.constant 8 : i32
    %32 = vector.broadcast %c8_i32 : i32 to vector<1x2048xi32>
    %33 = arith.shrsi %31, %32 : vector<1x2048xi32>
    %c16777215_i32 = arith.constant 16777215 : i32
    %34 = vector.broadcast %c16777215_i32 : i32 to vector<1x2048xi32>
    %35 = arith.andi %33, %34 : vector<1x2048xi32>
    %c8388608_i32 = arith.constant 8388608 : i32
    %36 = vector.broadcast %c8388608_i32 : i32 to vector<1x2048xi32>
    %37 = arith.cmpi sge, %35, %36 : vector<1x2048xi32>
    %c0_2 = arith.constant 0 : index
    %c0_3 = arith.constant 0 : index
    %38 = vector.load %arg2[%c0_2, %c0_3] : memref<1x2048xf32, #tpu.memory_space<vmem>>, vector<1x2048xf32>
    %cst = arith.constant 2.000000e+00 : f32
    %39 = vector.broadcast %cst : f32 to vector<1x2048xf32>
    %40 = arith.mulf %38, %39 : vector<1x2048xf32>
    %c0_i32 = arith.constant 0 : i32
    %41 = arith.sitofp %c0_i32 : i32 to f32
    %42 = vector.broadcast %41 : f32 to vector<1x2048xf32>
    %43 = arith.select %37, %40, %42 : vector<1x2048xi1>, vector<1x2048xf32>
    %c0_4 = arith.constant 0 : index
    %c0_5 = arith.constant 0 : index
    %44 = vector.load %arg3[%c0_4, %c0_5] : memref<1x2048xf32, #tpu.memory_space<vmem>>, vector<1x2048xf32>
    tpu.vector_store %arg3[%c0_4, %c0_5], %43 {strides = array<i32>} : memref<1x2048xf32, #tpu.memory_space<vmem>>, vector<1x2048xf32>,
    return
  }
  func.func @transform_0(%arg0: i32, %arg1: memref<1xi32, #tpu.memory_space<smem>>) -> (i32, i32) {
    %c0_i32 = arith.constant 0 : i32
    %c0_i32_0 = arith.constant 0 : i32
    return %arg0, %c0_i32 : i32, i32
  }
  func.func @transform_1(%arg0: i32, %arg1: memref<1xi32, #tpu.memory_space<smem>>) -> (i32, i32) {
    %c0_i32 = arith.constant 0 : i32
    %c0_i32_0 = arith.constant 0 : i32
    return %arg0, %c0_i32 : i32, i32
  }
}

</mosaic_0001>

<llo_original>
// kernel: tpu_custom_call.1
$region0: #{tpu_custom_call.1}
  #allocation0 [shape = 'u32[]', space=smem, size = 0x4, offset = 0x4, fixed_abs, tag = 'smem constant byte address 0x4 - core index']
  #allocation1 [shape = 'u32[144,128]{1,0:T(1,128)}', space=vmem, size = 0x12000, scoped, tag = 'internal scratch']
  #allocation2 [shape = 's32[1]{0}', space=sflag, size = 0x4, scoped, tag = 'scoped memory for tpu_custom_call.1']
  #allocation3 [shape = 's32[1]{0:T(128)S(6)}', space=smem, size = 0x200, scoped, tag = 'prefetched SMEM operand 0']
  %s0 = inlined_call_operand.<no memory space> [shape: s32[1], index: 0, kind: input, shape index: {}]
  %s1 = inlined_call_operand.hbm [shape: f32[1,2048], index: 1, kind: input, shape index: {}]
  %s2 = inlined_call_operand.hbm [shape: f32[1,2048], index: 2, kind: output, shape index: {}]
  %s3 = sld [smem:[#allocation0]]
  $region18: #{tpu_custom_call.1} parent=0
    _
  %s5 = ssub.s32 1, %s3
  %s6 = scalar_select 0, %s5, %s3
  %7 = sst [smem:[#allocation3]] %s0
  $region1: #{tpu_custom_call.1} parent=0
    #allocation4 [shape = 'u8[8192]{0}', space=vmem, size = 0x2000, scoped, tag = 'input window, operand 1, single buffered']
    #allocation5 [shape = 's32[1]{0}', space=sflag, size = 0x4, scoped, tag = 'scoped memory for tpu_custom_call.1']
    #allocation6 [shape = 's32[1]{0}', space=sflag, size = 0x4, scoped, tag = 'scoped memory for tpu_custom_call.1']
    #allocation7 [shape = 'u8[8192]{0}', space=vmem, size = 0x2000, scoped, tag = 'output window, operand 0, single buffered']
    %8 = vsyncpa [#allocation5], 0
    %9 = vsyncpa [#allocation6], 0
    // Predicated region
    $region2: #{tpu_custom_call.1} parent=1 // pred_check
      _
    $region3: #{tpu_custom_call.1} parent=1 // pred_check_branch
      %11 = sbr.rel (0) target = $region5
    $region4: #{tpu_custom_call.1} parent=1 // pred_region
      %s13 = ssub.s32 256, 256
      %14 = vsyncadd [#allocation5], %s13
      %s16 = sshll.u32 [#allocation4], 4
      %s17 = int_to_ptr.vmem [resolvable:$true] %s16
      %19 = dma.hbm_to_vmem [thread:$0]  %s1, 256, %s17, [#allocation5]
    $region5: #{tpu_custom_call.1} parent=1 // pred_fallthru
      _
    // Predicated region
    $region6: #{tpu_custom_call.1} parent=1 // pred_check
      _
    $region7: #{tpu_custom_call.1} parent=1 // pred_check_branch
      %21 = sbr.rel (0) target = $region9
    $region8: #{tpu_custom_call.1} parent=1 // pred_region
      %22 = dma.done [#allocation5], 256
    $region9: #{tpu_custom_call.1} parent=1 // pred_fallthru
      _
    %v23 = vlaneseq
    %v24 = vshrl.u32 %v23, 7
    %v25 = vstv 0
    %v26 = vadd.s32 %v24, %v25
    %v27 = vlaneseq
    %v28 = vand.u32 %v27, 127
    %v29 = vadd.s32 %v28, 128
    %v30 = vadd.s32 %v28, 256
    %v31 = vadd.s32 %v28, 384
    %v32 = vadd.s32 %v28, 512
    %v33 = vadd.s32 %v28, 640
    %v34 = vadd.s32 %v28, 768
    %v35 = vadd.s32 %v28, 896
    %v36 = vadd.s32 %v28, 1024
    %v37 = vadd.s32 %v28, 1152
    %v38 = vadd.s32 %v28, 1280
    %v39 = vadd.s32 %v28, 1408
    %v40 = vadd.s32 %v28, 1536
    %v41 = vadd.s32 %v28, 1664
    %v42 = vadd.s32 %v28, 1792
    %v43 = vadd.s32 %v28, 1920
    %v44 = vmul.u32 %v26, 2048
    %v45 = vadd.s32 %v44, %v28
    %v46 = vadd.s32 %v44, %v29
    %v47 = vadd.s32 %v44, %v30
    %v48 = vadd.s32 %v44, %v31
    %v49 = vadd.s32 %v44, %v32
    %v50 = vadd.s32 %v44, %v33
    %v51 = vadd.s32 %v44, %v34
    %v52 = vadd.s32 %v44, %v35
    %v53 = vadd.s32 %v44, %v36
    %v54 = vadd.s32 %v44, %v37
    %v55 = vadd.s32 %v44, %v38
    %v56 = vadd.s32 %v44, %v39
    %v57 = vadd.s32 %v44, %v40
    %v58 = vadd.s32 %v44, %v41
    %v59 = vadd.s32 %v44, %v42
    %v60 = vadd.s32 %v44, %v43
    %v61 = vmul.u32 %v45, 2654435769
    %v62 = vmul.u32 %v46, 2654435769
    %v63 = vmul.u32 %v47, 2654435769
    %v64 = vmul.u32 %v48, 2654435769
    %v65 = vmul.u32 %v49, 2654435769
    %v66 = vmul.u32 %v50, 2654435769
    %v67 = vmul.u32 %v51, 2654435769
    %v68 = vmul.u32 %v52, 2654435769
    %v69 = vmul.u32 %v53, 2654435769
    %v70 = vmul.u32 %v54, 2654435769
    %v71 = vmul.u32 %v55, 2654435769
    %v72 = vmul.u32 %v56, 2654435769
    %v73 = vmul.u32 %v57, 2654435769
    %v74 = vmul.u32 %v58, 2654435769
    %v75 = vmul.u32 %v59, 2654435769
    %v76 = vmul.u32 %v60, 2654435769
    %s77 = sld [smem:[#allocation3]]
    %v78 = vstv %s77
    %v79 = vadd.s32 %v61, %v78
    %v80 = vadd.s32 %v62, %v78
    %v81 = vadd.s32 %v63, %v78
    %v82 = vadd.s32 %v64, %v78
    %v83 = vadd.s32 %v65, %v78
    %v84 = vadd.s32 %v66, %v78
    %v85 = vadd.s32 %v67, %v78
    %v86 = vadd.s32 %v68, %v78
    %v87 = vadd.s32 %v69, %v78
    %v88 = vadd.s32 %v70, %v78
    %v89 = vadd.s32 %v71, %v78
    %v90 = vadd.s32 %v72, %v78
    %v91 = vadd.s32 %v73, %v78
    %v92 = vadd.s32 %v74, %v78
    %v93 = vadd.s32 %v75, %v78
    %v94 = vadd.s32 %v76, %v78
    %v95 = vshra.s32 %v79, 16
    %v96 = vshra.s32 %v80, 16
    %v97 = vshra.s32 %v81, 16
    %v98 = vshra.s32 %v82, 16
    %v99 = vshra.s32 %v83, 16
    %v100 = vshra.s32 %v84, 16
    %v101 = vshra.s32 %v85, 16
    %v102 = vshra.s32 %v86, 16
    %v103 = vshra.s32 %v87, 16
    %v104 = vshra.s32 %v88, 16
    %v105 = vshra.s32 %v89, 16
    %v106 = vshra.s32 %v90, 16
    %v107 = vshra.s32 %v91, 16
    %v108 = vshra.s32 %v92, 16
    %v109 = vshra.s32 %v93, 16
    %v110 = vshra.s32 %v94, 16
    %v111 = vand.u32 %v95, 65535
    %v112 = vand.u32 %v96, 65535
    %v113 = vand.u32 %v97, 65535
    %v114 = vand.u32 %v98, 65535
    %v115 = vand.u32 %v99, 65535
    %v116 = vand.u32 %v100, 65535
    %v117 = vand.u32 %v101, 65535
    %v118 = vand.u32 %v102, 65535
    %v119 = vand.u32 %v103, 65535
    %v120 = vand.u32 %v104, 65535
    %v121 = vand.u32 %v105, 65535
    %v122 = vand.u32 %v106, 65535
    %v123 = vand.u32 %v107, 65535
    %v124 = vand.u32 %v108, 65535
    %v125 = vand.u32 %v109, 65535
    %v126 = vand.u32 %v110, 65535
    %v127 = vxor.u32 %v79, %v111
    %v128 = vxor.u32 %v80, %v112
    %v129 = vxor.u32 %v81, %v113
    %v130 = vxor.u32 %v82, %v114
    %v131 = vxor.u32 %v83, %v115
    %v132 = vxor.u32 %v84, %v116
    %v133 = vxor.u32 %v85, %v117
    %v134 = vxor.u32 %v86, %v118
    %v135 = vxor.u32 %v87, %v119
    %v136 = vxor.u32 %v88, %v120
    %v137 = vxor.u32 %v89, %v121
    %v138 = vxor.u32 %v90, %v122
    %v139 = vxor.u32 %v91, %v123
    %v140 = vxor.u32 %v92, %v124
    %v141 = vxor.u32 %v93, %v125
    %v142 = vxor.u32 %v94, %v126
    %v143 = vmul.u32 %v127, 2146121005
    %v144 = vmul.u32 %v128, 2146121005
    %v145 = vmul.u32 %v129, 2146121005
    %v146 = vmul.u32 %v130, 2146121005
    %v147 = vmul.u32 %v131, 2146121005
    %v148 = vmul.u32 %v132, 2146121005
    %v149 = vmul.u32 %v133, 2146121005
    %v150 = vmul.u32 %v134, 2146121005
    %v151 = vmul.u32 %v135, 2146121005
    %v152 = vmul.u32 %v136, 2146121005
    %v153 = vmul.u32 %v137, 2146121005
    %v154 = vmul.u32 %v138, 2146121005
    %v155 = vmul.u32 %v139, 2146121005
    %v156 = vmul.u32 %v140, 2146121005
    %v157 = vmul.u32 %v141, 2146121005
    %v158 = vmul.u32 %v142, 2146121005
    %v159 = vshra.s32 %v143, 15
    %v160 = vshra.s32 %v144, 15
    %v161 = vshra.s32 %v145, 15
    %v162 = vshra.s32 %v146, 15
    %v163 = vshra.s32 %v147, 15
    %v164 = vshra.s32 %v148, 15
    %v165 = vshra.s32 %v149, 15
    %v166 = vshra.s32 %v150, 15
    %v167 = vshra.s32 %v151, 15
    %v168 = vshra.s32 %v152, 15
    %v169 = vshra.s32 %v153, 15
    %v170 = vshra.s32 %v154, 15
    %v171 = vshra.s32 %v155, 15
    %v172 = vshra.s32 %v156, 15
    %v173 = vshra.s32 %v157, 15
    %v174 = vshra.s32 %v158, 15
    %v175 = vand.u32 %v159, 131071
    %v176 = vand.u32 %v160, 131071
    %v177 = vand.u32 %v161, 131071
    %v178 = vand.u32 %v162, 131071
    %v179 = vand.u32 %v163, 131071
    %v180 = vand.u32 %v164, 131071
    %v181 = vand.u32 %v165, 131071
    %v182 = vand.u32 %v166, 131071
    %v183 = vand.u32 %v167, 131071
    %v184 = vand.u32 %v168, 131071
    %v185 = vand.u32 %v169, 131071
    %v186 = vand.u32 %v170, 131071
    %v187 = vand.u32 %v171, 131071
    %v188 = vand.u32 %v172, 131071
    %v189 = vand.u32 %v173, 131071
    %v190 = vand.u32 %v174, 131071
    %v191 = vxor.u32 %v143, %v175
    %v192 = vxor.u32 %v144, %v176
    %v193 = vxor.u32 %v145, %v177
    %v194 = vxor.u32 %v146, %v178
    %v195 = vxor.u32 %v147, %v179
    %v196 = vxor.u32 %v148, %v180
    %v197 = vxor.u32 %v149, %v181
    %v198 = vxor.u32 %v150, %v182
    %v199 = vxor.u32 %v151, %v183
    %v200 = vxor.u32 %v152, %v184
    %v201 = vxor.u32 %v153, %v185
    %v202 = vxor.u32 %v154, %v186
    %v203 = vxor.u32 %v155, %v187
    %v204 = vxor.u32 %v156, %v188
    %v205 = vxor.u32 %v157, %v189
    %v206 = vxor.u32 %v158, %v190
    %v207 = vmul.u32 %v191, 2221713035
    %v208 = vmul.u32 %v192, 2221713035
    %v209 = vmul.u32 %v193, 2221713035
    %v210 = vmul.u32 %v194, 2221713035
    %v211 = vmul.u32 %v195, 2221713035
    %v212 = vmul.u32 %v196, 2221713035
    %v213 = vmul.u32 %v197, 2221713035
    %v214 = vmul.u32 %v198, 2221713035
    %v215 = vmul.u32 %v199, 2221713035
    %v216 = vmul.u32 %v200, 2221713035
    %v217 = vmul.u32 %v201, 2221713035
    %v218 = vmul.u32 %v202, 2221713035
    %v219 = vmul.u32 %v203, 2221713035
    %v220 = vmul.u32 %v204, 2221713035
    %v221 = vmul.u32 %v205, 2221713035
    %v222 = vmul.u32 %v206, 2221713035
    %v223 = vshra.s32 %v207, 16
    %v224 = vshra.s32 %v208, 16
    %v225 = vshra.s32 %v209, 16
    %v226 = vshra.s32 %v210, 16
    %v227 = vshra.s32 %v211, 16
    %v228 = vshra.s32 %v212, 16
    %v229 = vshra.s32 %v213, 16
    %v230 = vshra.s32 %v214, 16
    %v231 = vshra.s32 %v215, 16
    %v232 = vshra.s32 %v216, 16
    %v233 = vshra.s32 %v217, 16
    %v234 = vshra.s32 %v218, 16
    %v235 = vshra.s32 %v219, 16
    %v236 = vshra.s32 %v220, 16
    %v237 = vshra.s32 %v221, 16
    %v238 = vshra.s32 %v222, 16
    %v239 = vand.u32 %v223, 65535
    %v240 = vand.u32 %v224, 65535
    %v241 = vand.u32 %v225, 65535
    %v242 = vand.u32 %v226, 65535
    %v243 = vand.u32 %v227, 65535
    %v244 = vand.u32 %v228, 65535
    %v245 = vand.u32 %v229, 65535
    %v246 = vand.u32 %v230, 65535
    %v247 = vand.u32 %v231, 65535
    %v248 = vand.u32 %v232, 65535
    %v249 = vand.u32 %v233, 65535
    %v250 = vand.u32 %v234, 65535
    %v251 = vand.u32 %v235, 65535
    %v252 = vand.u32 %v236, 65535
    %v253 = vand.u32 %v237, 65535
    %v254 = vand.u32 %v238, 65535
    %v255 = vxor.u32 %v207, %v239
    %v256 = vxor.u32 %v208, %v240
    %v257 = vxor.u32 %v209, %v241
    %v258 = vxor.u32 %v210, %v242
    %v259 = vxor.u32 %v211, %v243
    %v260 = vxor.u32 %v212, %v244
    %v261 = vxor.u32 %v213, %v245
    %v262 = vxor.u32 %v214, %v246
    %v263 = vxor.u32 %v215, %v247
    %v264 = vxor.u32 %v216, %v248
    %v265 = vxor.u32 %v217, %v249
    %v266 = vxor.u32 %v218, %v250
    %v267 = vxor.u32 %v219, %v251
    %v268 = vxor.u32 %v220, %v252
    %v269 = vxor.u32 %v221, %v253
    %v270 = vxor.u32 %v222, %v254
    %v271 = vshra.s32 %v255, 8
    %v272 = vshra.s32 %v256, 8
    %v273 = vshra.s32 %v257, 8
    %v274 = vshra.s32 %v258, 8
    %v275 = vshra.s32 %v259, 8
    %v276 = vshra.s32 %v260, 8
    %v277 = vshra.s32 %v261, 8
    %v278 = vshra.s32 %v262, 8
    %v279 = vshra.s32 %v263, 8
    %v280 = vshra.s32 %v264, 8
    %v281 = vshra.s32 %v265, 8
    %v282 = vshra.s32 %v266, 8
    %v283 = vshra.s32 %v267, 8
    %v284 = vshra.s32 %v268, 8
    %v285 = vshra.s32 %v269, 8
    %v286 = vshra.s32 %v270, 8
    %v287 = vand.u32 %v271, 16777215
    %v288 = vand.u32 %v272, 16777215
    %v289 = vand.u32 %v273, 16777215
    %v290 = vand.u32 %v274, 16777215
    %v291 = vand.u32 %v275, 16777215
    %v292 = vand.u32 %v276, 16777215
    %v293 = vand.u32 %v277, 16777215
    %v294 = vand.u32 %v278, 16777215
    %v295 = vand.u32 %v279, 16777215
    %v296 = vand.u32 %v280, 16777215
    %v297 = vand.u32 %v281, 16777215
    %v298 = vand.u32 %v282, 16777215
    %v299 = vand.u32 %v283, 16777215
    %v300 = vand.u32 %v284, 16777215
    %v301 = vand.u32 %v285, 16777215
    %v302 = vand.u32 %v286, 16777215
    %vm303 = vcmp.ge.s32.totalorder %v287, 8388608
    %vm304 = vcmp.ge.s32.totalorder %v288, 8388608
    %vm305 = vcmp.ge.s32.totalorder %v289, 8388608
    %vm306 = vcmp.ge.s32.totalorder %v290, 8388608
    %vm307 = vcmp.ge.s32.totalorder %v291, 8388608
    %vm308 = vcmp.ge.s32.totalorder %v292, 8388608
    %vm309 = vcmp.ge.s32.totalorder %v293, 8388608
    %vm310 = vcmp.ge.s32.totalorder %v294, 8388608
    %vm311 = vcmp.ge.s32.totalorder %v295, 8388608
    %vm312 = vcmp.ge.s32.totalorder %v296, 8388608
    %vm313 = vcmp.ge.s32.totalorder %v297, 8388608
    %vm314 = vcmp.ge.s32.totalorder %v298, 8388608
    %vm315 = vcmp.ge.s32.totalorder %v299, 8388608
    %vm316 = vcmp.ge.s32.totalorder %v300, 8388608
    %vm317 = vcmp.ge.s32.totalorder %v301, 8388608
    %vm318 = vcmp.ge.s32.totalorder %v302, 8388608
    %v319 = vld [vmem:[#allocation4] sm:$0xff]
    %v320 = vld [vmem:[#allocation4 + $0x8] sm:$0xff]
    %v321 = vmul.f32 %v319, 2.0
    %v322 = vmul.f32 %v320, 2.0
    %v325 = vlaneseq
    %v326 = vshrl.u32 %v325, 7
    %v327 = vsub.s32 0, %v326
    %v328 = vrot.slane %v321, %v327
    %v329 = vlaneseq
    %v330 = vshrl.u32 %v329, 7
    %v331 = vsub.s32 1, %v330
    %v332 = vrot.slane %v321, %v331
    %v333 = vlaneseq
    %v334 = vshrl.u32 %v333, 7
    %v335 = vsub.s32 2, %v334
    %v336 = vrot.slane %v321, %v335
    %v337 = vlaneseq
    %v338 = vshrl.u32 %v337, 7
    %v339 = vsub.s32 3, %v338
    %v340 = vrot.slane %v321, %v339
    %v341 = vlaneseq
    %v342 = vshrl.u32 %v341, 7
    %v343 = vsub.s32 4, %v342
    %v344 = vrot.slane %v321, %v343
    %v345 = vlaneseq
    %v346 = vshrl.u32 %v345, 7
    %v347 = vsub.s32 5, %v346
    %v348 = vrot.slane %v321, %v347
    %v349 = vlaneseq
    %v350 = vshrl.u32 %v349, 7
    %v351 = vsub.s32 6, %v350
    %v352 = vrot.slane %v321, %v351
    %v353 = vlaneseq
    %v354 = vshrl.u32 %v353, 7
    %v355 = vsub.s32 7, %v354
    %v356 = vrot.slane %v321, %v355
    %v357 = vlaneseq
    %v358 = vshrl.u32 %v357, 7
    %v359 = vsub.s32 0, %v358
    %v360 = vrot.slane %v322, %v359
    %v361 = vlaneseq
    %v362 = vshrl.u32 %v361, 7
    %v363 = vsub.s32 1, %v362
    %v364 = vrot.slane %v322, %v363
    %v365 = vlaneseq
    %v366 = vshrl.u32 %v365, 7
    %v367 = vsub.s32 2, %v366
    %v368 = vrot.slane %v322, %v367
    %v369 = vlaneseq
    %v370 = vshrl.u32 %v369, 7
    %v371 = vsub.s32 3, %v370
    %v372 = vrot.slane %v322, %v371
    %v373 = vlaneseq
    %v374 = vshrl.u32 %v373, 7
    %v375 = vsub.s32 4, %v374
    %v376 = vrot.slane %v322, %v375
    %v377 = vlaneseq
    %v378 = vshrl.u32 %v377, 7
    %v379 = vsub.s32 5, %v378
    %v380 = vrot.slane %v322, %v379
    %v381 = vlaneseq
    %v382 = vshrl.u32 %v381, 7
    %v383 = vsub.s32 6, %v382
    %v384 = vrot.slane %v322, %v383
    %v385 = vlaneseq
    %v386 = vshrl.u32 %v385, 7
    %v387 = vsub.s32 7, %v386
    %v388 = vrot.slane %v322, %v387
    %v405 = vsel %vm303, %v328, 0.0
    %v406 = vsel %vm304, %v332, 0.0
    %v407 = vsel %vm305, %v336, 0.0
    %v408 = vsel %vm306, %v340, 0.0
    %v409 = vsel %vm307, %v344, 0.0
    %v410 = vsel %vm308, %v348, 0.0
    %v411 = vsel %vm309, %v352, 0.0
    %v412 = vsel %vm310, %v356, 0.0
    %v413 = vsel %vm311, %v360, 0.0
    %v414 = vsel %vm312, %v364, 0.0
    %v415 = vsel %vm313, %v368, 0.0
    %v416 = vsel %vm314, %v372, 0.0
    %v417 = vsel %vm315, %v376, 0.0
    %v418 = vsel %vm316, %v380, 0.0
    %v419 = vsel %vm317, %v384, 0.0
    %v420 = vsel %vm318, %v388, 0.0
    %v437 = vcombine.low %v405, %v406
    %v438 = vcombine.low %v407, %v408
    %v439 = vcombine.low %v409, %v410
    %v440 = vcombine.low %v411, %v412
    %v442 = vunpack.c.l.s4 1966171168
    %v443 = vunpack.c.0.s8 %v442
    %v444 = vlaneseq
    %v445 = vshrl.u32 %v444, 7
    %v446 = vsub.s32 %v443, %v445
    %v447 = vrot.slane %v437, %v446
    %v449 = vunpack.c.l.s4 1966171168
    %v450 = vunpack.c.0.s8 %v449
    %v451 = vlaneseq
    %v452 = vshrl.u32 %v451, 7
    %v453 = vsub.s32 %v450, %v452
    %v454 = vrot.slane %v438, %v453
    %v456 = vunpack.c.l.s4 1966171168
    %v457 = vunpack.c.0.s8 %v456
    %v458 = vlaneseq
    %v459 = vshrl.u32 %v458, 7
    %v460 = vsub.s32 %v457, %v459
    %v461 = vrot.slane %v439, %v460
    %v463 = vunpack.c.l.s4 1966171168
    %v464 = vunpack.c.0.s8 %v463
    %v465 = vlaneseq
    %v466 = vshrl.u32 %v465, 7
    %v467 = vsub.s32 %v464, %v466
    %v468 = vrot.slane %v440, %v467
    %v469 = vcombine.low %v447, %v454
    %v470 = vcombine.low %v461, %v468
    %v472 = vunpack.c.l.s4 1966171168
    %v473 = vunpack.c.0.s8 %v472
    %v474 = vlaneseq
    %v475 = vshrl.u32 %v474, 7
    %v476 = vsub.s32 %v473, %v475
    %v477 = vrot.slane %v469, %v476
    %v479 = vunpack.c.l.s4 1966171168
    %v480 = vunpack.c.0.s8 %v479
    %v481 = vlaneseq
    %v482 = vshrl.u32 %v481, 7
    %v483 = vsub.s32 %v480, %v482
    %v484 = vrot.slane %v470, %v483
    %v485 = vcombine.low %v477, %v484
    %v486 = vcombine.low %v413, %v414
    %v487 = vcombine.low %v415, %v416
    %v488 = vcombine.low %v417, %v418
    %v489 = vcombine.low %v419, %v420
    %v491 = vunpack.c.l.s4 1966171168
    %v492 = vunpack.c.0.s8 %v491
    %v493 = vlaneseq
    %v494 = vshrl.u32 %v493, 7
    %v495 = vsub.s32 %v492, %v494
    %v496 = vrot.slane %v486, %v495
    %v498 = vunpack.c.l.s4 1966171168
    %v499 = vunpack.c.0.s8 %v498
    %v500 = vlaneseq
    %v501 = vshrl.u32 %v500, 7
    %v502 = vsub.s32 %v499, %v501
    %v503 = vrot.slane %v487, %v502
    %v505 = vunpack.c.l.s4 1966171168
    %v506 = vunpack.c.0.s8 %v505
    %v507 = vlaneseq
    %v508 = vshrl.u32 %v507, 7
    %v509 = vsub.s32 %v506, %v508
    %v510 = vrot.slane %v488, %v509
    %v512 = vunpack.c.l.s4 1966171168
    %v513 = vunpack.c.0.s8 %v512
    %v514 = vlaneseq
    %v515 = vshrl.u32 %v514, 7
    %v516 = vsub.s32 %v513, %v515
    %v517 = vrot.slane %v489, %v516
    %v518 = vcombine.low %v496, %v503
    %v519 = vcombine.low %v510, %v517
    %v521 = vunpack.c.l.s4 1966171168
    %v522 = vunpack.c.0.s8 %v521
    %v523 = vlaneseq
    %v524 = vshrl.u32 %v523, 7
    %v525 = vsub.s32 %v522, %v524
    %v526 = vrot.slane %v518, %v525
    %v528 = vunpack.c.l.s4 1966171168
    %v529 = vunpack.c.0.s8 %v528
    %v530 = vlaneseq
    %v531 = vshrl.u32 %v530, 7
    %v532 = vsub.s32 %v529, %v531
    %v533 = vrot.slane %v519, %v532
    %v534 = vcombine.low %v526, %v533
    %537 = vst [vmem:[#allocation7] sm:$0xff] %v485
    %538 = vst [vmem:[#allocation7 + $0x8] sm:$0xff] %v534
    // Predicated region
    $region10: #{tpu_custom_call.1} parent=1 // pred_check
      _
    $region11: #{tpu_custom_call.1} parent=1 // pred_check_branch
      %540 = sbr.rel (0) target = $region13
    $region12: #{tpu_custom_call.1} parent=1 // pred_region
      %s542 = ssub.s32 256, 256
      %543 = vsyncadd [#allocation6], %s542
      %s545 = sshll.u32 [#allocation7], 4
      %s546 = int_to_ptr.vmem [resolvable:$true] %s545
      %548 = dma.vmem_to_hbm [thread:$0]  %s546, 256, %s2, [#allocation6]
    $region13: #{tpu_custom_call.1} parent=1 // pred_fallthru
      _
    // Predicated region
    $region14: #{tpu_custom_call.1} parent=1 // pred_check
      _
    $region15: #{tpu_custom_call.1} parent=1 // pred_check_branch
      %550 = sbr.rel (0) target = $region17
    $region16: #{tpu_custom_call.1} parent=1 // pred_region
      %551 = dma.done [#allocation6], 256
    $region17: #{tpu_custom_call.1} parent=1 // pred_fallthru
      _
    %552 = vsyncpa [#allocation5], 1
    %553 = vsyncpa [#allocation6], 1

</llo_original>
